<compile_context>
chip_gen: v5e
topology: v5e:2x2
jax: 0.10.0
libtpu: 0.0.40
codegen_flags: <defaults>
</compile_context>

<pallas_src>
import functools
import math

import jax
import jax.numpy as jnp
from jax.experimental import pallas as pl
from jax.experimental.pallas import tpu as pltpu


def _round_up(x, m):
    return ((x + m - 1) // m) * m


def _gcn_matmul_kernel(*refs, tk, cast_dtype, b_resident, has_bias):
    """One (row-tile i, k-step) grid point of C = A @ B (+ bias).

    A is tiled (tm, tk); B is either a full VMEM-resident (Kp, Np) block
    (sliced by k in-kernel) or a (tk, Np) streamed block; output covers the
    full Np width so A is streamed from HBM exactly once.
    """
    if has_bias:
        a_ref, b_ref, bias_ref, o_ref, acc_ref = refs
    else:
        a_ref, b_ref, o_ref, acc_ref = refs
        bias_ref = None

    k = pl.program_id(1)

    @pl.when(k == 0)
    def _init():
        acc_ref[...] = jnp.zeros_like(acc_ref)

    a = a_ref[...]
    if b_resident:
        start = pl.multiple_of(k * tk, tk)
        b = b_ref[pl.ds(start, tk), :]
    else:
        b = b_ref[...]

    if cast_dtype is not None:
        # Per-tile cast on the VPU; HBM keeps the stored dtype.
        a = a.astype(cast_dtype)
        b = b.astype(cast_dtype)

    acc_ref[...] += jnp.dot(a, b, preferred_element_type=jnp.float32)

    @pl.when(k == pl.num_programs(1) - 1)
    def _store():
        out = acc_ref[...]
        if bias_ref is not None:
            out = out + bias_ref[...]
        o_ref[...] = out.astype(o_ref.dtype)


def _gcn_matmul(a, b, bias=None, *, out_dtype, tm=512, tk=1024,
                cast_dtype=jnp.bfloat16,
                vmem_budget=40 * 1024 * 1024,
                b_resident_bytes=16 * 1024 * 1024):
    """C = A @ B (+ bias) with grid (row tiles, k steps); no output-col axis."""
    M, K = a.shape
    K2, F = b.shape
    assert K == K2

    Np = _round_up(F, 128)                # full output width (lane aligned)
    tm = min(tm, _round_up(M, 16))        # 16: bf16 sublane packing granularity
    tk = min(tk, _round_up(K, 128))

    # Give the parallel row axis >= 2 blocks when possible (v7x: 2 TensorCores).
    if M > 256 and _round_up(M, tm) // tm < 2:
        tm = _round_up((M + 1) // 2, 16)

    a_item = a.dtype.itemsize
    b_item = b.dtype.itemsize
    out_item = jnp.dtype(out_dtype).itemsize

    def est_vmem(tm_, tk_, resident_):
        kp_ = _round_up(K, tk_)
        b_rows = kp_ if resident_ else tk_
        return (2 * tm_ * tk_ * a_item          # A tile, double buffered
                + 2 * b_rows * Np * b_item      # B (resident or streamed)
                + 2 * tm_ * Np * out_item       # output tile
                + tm_ * Np * 4                  # f32 accumulator
                + 2 * Np * 4)                   # bias

    # Keep the whole B operand VMEM-resident when small: DMA'd from HBM once
    # instead of once per row tile.
    b_resident = (2 * _round_up(K, tk) * Np * b_item) <= b_resident_bytes
    if est_vmem(tm, tk, b_resident) > vmem_budget:
        b_resident = False
    while est_vmem(tm, tk, b_resident) > vmem_budget and tk > 256:
        tk = max(256, _round_up(tk // 2, 128))
    while est_vmem(tm, tk, b_resident) > vmem_budget and tm > 128:
        tm = max(128, _round_up(tm // 2, 16))

    Mp = _round_up(M, tm)
    Kp = _round_up(K, tk)

    # Zero-padding is numerically inert for the matmul; skipped when aligned
    # so the big adjacency never takes an extra XLA pad/cast pass.
    a_p = a if (Mp == M and Kp == K) else jnp.pad(a, ((0, Mp - M), (0, Kp - K)))
    b_p = b if (Kp == K and Np == F) else jnp.pad(b, ((0, Kp - K), (0, Np - F)))

    if b_resident:
        b_spec = pl.BlockSpec((Kp, Np), lambda i, k: (0, 0))
    else:
        b_spec = pl.BlockSpec((tk, Np), lambda i, k: (k, 0))

    in_specs = [pl.BlockSpec((tm, tk), lambda i, k: (i, k)), b_spec]
    operands = [a_p, b_p]

    has_bias = bias is not None
    if has_bias:
        bias_p = bias.reshape(1, -1).astype(jnp.float32)
        if Np != F:
            bias_p = jnp.pad(bias_p, ((0, 0), (0, Np - F)))
        in_specs.append(pl.BlockSpec((1, Np), lambda i, k: (0, 0)))
        operands.append(bias_p)

    kernel = functools.partial(
        _gcn_matmul_kernel, tk=tk, cast_dtype=cast_dtype,
        b_resident=b_resident, has_bias=has_bias)

    # Generation-aware scoped VMEM limit: ~96 MiB on v5e/v6e (128 MiB phys),
    # ~48 MiB on v7x (64 MiB phys).
    try:
        vmem_phys = int(getattr(pltpu.get_tpu_info(), "vmem_capacity_bytes",
                                64 * 1024 * 1024))
    except Exception:
        vmem_phys = 64 * 1024 * 1024
    vmem_limit = max(48 * 1024 * 1024,
                     min(96 * 1024 * 1024, vmem_phys * 3 // 4))

    out = pl.pallas_call(
        kernel,
        out_shape=jax.ShapeDtypeStruct((Mp, Np), out_dtype),
        grid_spec=pltpu.PrefetchScalarGridSpec(
            num_scalar_prefetch=0,
            grid=(Mp // tm, Kp // tk),
            in_specs=in_specs,
            out_specs=pl.BlockSpec((tm, Np), lambda i, k: (i, 0)),
            scratch_shapes=[pltpu.VMEM((tm, Np), jnp.float32)],
        ),
        compiler_params=pltpu.CompilerParams(
            dimension_semantics=("parallel", "arbitrary"),
            vmem_limit_bytes=vmem_limit,
        ),
    )(*operands)

    if Mp == M and Np == F:
        return out
    return out[:M, :F]


def graph_convolution(x, adj, weight, bias=None):
    """Pallas GCN layer: adj @ (x @ weight) + bias."""
    N, f_in = x.shape
    f_out = weight.shape[1]
    assert adj.shape == (N, N)
    assert weight.shape[0] == f_in
    out_dtype = x.dtype

    # Stage 1 (hoisted, runs once): support = x @ W.  Small GEMM, kept in f32
    # end-to-end so support is only rounded once (to bf16, inside stage 2).
    support = _gcn_matmul(x, weight, out_dtype=jnp.float32,
                          tm=512, tk=512, cast_dtype=None)

    # Stage 2: out = adj @ support (+ bias).  HBM-bound: adj stays in its
    # stored dtype in HBM, is streamed exactly once (no output-column grid
    # axis), and is cast to bf16 per-tile inside the kernel; support is
    # VMEM-resident when it fits.
    out = _gcn_matmul(adj, support, bias, out_dtype=out_dtype,
                      tm=512, tk=1024, cast_dtype=jnp.bfloat16)
    return out


if __name__ == "__main__":
    # Small, TPU-friendly demo shapes.
    N = 128          # number of graph nodes
    F_IN = 64        # in_features
    F_OUT = 128      # out_features

    key = jax.random.PRNGKey(0)
    k_x, k_adj, k_w, k_b = jax.random.split(key, 4)

    # Deterministic parameter init mirroring reset_parameters():
    #   stdv = 1 / sqrt(out_features); uniform(-stdv, stdv)
    stdv = 1.0 / math.sqrt(F_OUT)
    weight = jax.random.uniform(k_w, (F_IN, F_OUT), jnp.float32, -stdv, stdv)
    bias = jax.random.uniform(k_b, (F_OUT,), jnp.float32, -stdv, stdv)

    # Example inputs: node features + a (dense) row-normalized adjacency.
    x = jax.random.normal(k_x, (N, F_IN), jnp.float32)
    adj_raw = (jax.random.uniform(k_adj, (N, N)) < 0.1).astype(jnp.float32)
    adj_raw = adj_raw + jnp.eye(N, dtype=jnp.float32)        # self-loops
    adj = adj_raw / jnp.sum(adj_raw, axis=1, keepdims=True)  # row-normalize

    out = graph_convolution(x, adj, weight, bias)
    jax.block_until_ready(out)

    # Reference check in plain JAX (f32); tolerance sized for the bf16
    # adjacency/support path (f32 accumulation keeps error well inside it).
    ref = adj @ (x @ weight) + bias
    assert out.shape == (N, F_OUT)
    assert jnp.allclose(out, ref, atol=2e-2, rtol=2e-2)

    print("KERNEL_OK")
</pallas_src>

<mosaic_0001>
module attributes {stable_mosaic.version = 11 : i64} {
  func.func @_gcn_matmul_kernel(%arg0: i32, %arg1: i32, %arg2: memref<128x128xf32, #tpu.memory_space<vmem>>, %arg3: memref<128x128xf32, #tpu.memory_space<vmem>>, %arg4: memref<128x128xf32, #tpu.memory_space<vmem>>, %arg5: memref<128x128xf32, #tpu.memory_space<vmem>>) attributes {dimension_semantics = [#tpu.dimension_semantics<parallel>, #tpu.dimension_semantics<arbitrary>], iteration_bounds = array<i64: 1, 1>, scalar_prefetch = 0 : i64, scratch_operands = 1 : i64, tpu.core_type = #tpu.core_type<tc>, window_params = [{transform_indices = @transform_0, window_bounds = array<i64: 128, 128>}, {pipeline_mode = #tpu.pipeline_mode<synchronous>, transform_indices = @transform_1, window_bounds = array<i64: 128, 128>}, {transform_indices = @transform_2, window_bounds = array<i64: 128, 128>}]} {
    %c0_i32 = arith.constant 0 : i32
    %0 = arith.cmpi eq, %arg1, %c0_i32 : i32
    %1 = arith.extui %0 : i1 to i32
    %c0_i32_0 = arith.constant 0 : i32
    %2 = arith.cmpi ne, %1, %c0_i32_0 : i32
    scf.if %2 {
      %cst_9 = arith.constant 0.000000e+00 : f32
      %15 = vector.broadcast %cst_9 : f32 to vector<128x128xf32>
      %c0_10 = arith.constant 0 : index
      %c0_11 = arith.constant 0 : index
      %16 = vector.load %arg5[%c0_10, %c0_11] : memref<128x128xf32, #tpu.memory_space<vmem>>, vector<128x128xf32>
      tpu.vector_store %arg5[%c0_10, %c0_11], %15 {strides = array<i32>} : memref<128x128xf32, #tpu.memory_space<vmem>>, vector<128x128xf32>,
    } else {
    }
    %c0 = arith.constant 0 : index
    %c0_1 = arith.constant 0 : index
    %3 = vector.load %arg2[%c0, %c0_1] : memref<128x128xf32, #tpu.memory_space<vmem>>, vector<128x128xf32>
    %c128_i32 = arith.constant 128 : i32
    %4 = arith.muli %arg1, %c128_i32 : i32
    %5 = tpu.assume_multiple %4, 128 : i32
    %6 = arith.index_cast %5 : i32 to index
    %c0_2 = arith.constant 0 : index
    %7 = vector.load %arg3[%6, %c0_2] : memref<128x128xf32, #tpu.memory_space<vmem>>, vector<128x128xf32>
    %c0_3 = arith.constant 0 : index
    %c0_4 = arith.constant 0 : index
    %8 = vector.load %arg5[%c0_3, %c0_4] : memref<128x128xf32, #tpu.memory_space<vmem>>, vector<128x128xf32>
    %cst = arith.constant dense<0.000000e+00> : vector<128x128xf32>
    %9 = tpu.matmul %3, %7, %cst {dimension_numbers = #tpu.dot_dimension_numbers<[1], [0], [0], [1], [0, 0, 1, 1], [], []>} : vector<128x128xf32>, vector<128x128xf32>, vector<128x128xf32> -> vector<128x128xf32>
    %10 = arith.addf %8, %9 : vector<128x128xf32>
    %c0_5 = arith.constant 0 : index
    %c0_6 = arith.constant 0 : index
    %11 = vector.load %arg5[%c0_5, %c0_6] : memref<128x128xf32, #tpu.memory_space<vmem>>, vector<128x128xf32>
    tpu.vector_store %arg5[%c0_5, %c0_6], %10 {strides = array<i32>} : memref<128x128xf32, #tpu.memory_space<vmem>>, vector<128x128xf32>,
    %c0_i32_7 = arith.constant 0 : i32
    %12 = arith.cmpi eq, %arg1, %c0_i32_7 : i32
    %13 = arith.extui %12 : i1 to i32
    %c0_i32_8 = arith.constant 0 : i32
    %14 = arith.cmpi ne, %13, %c0_i32_8 : i32
    scf.if %14 {
      %c0_9 = arith.constant 0 : index
      %c0_10 = arith.constant 0 : index
      %15 = vector.load %arg5[%c0_9, %c0_10] : memref<128x128xf32, #tpu.memory_space<vmem>>, vector<128x128xf32>
      %c0_11 = arith.constant 0 : index
      %c0_12 = arith.constant 0 : index
      %16 = vector.load %arg4[%c0_11, %c0_12] : memref<128x128xf32, #tpu.memory_space<vmem>>, vector<128x128xf32>
      tpu.vector_store %arg4[%c0_11, %c0_12], %15 {strides = array<i32>} : memref<128x128xf32, #tpu.memory_space<vmem>>, vector<128x128xf32>,
    } else {
    }
    return
  }
  func.func @transform_0(%arg0: i32, %arg1: i32) -> (i32, i32) {
    %c0_i32 = arith.constant 0 : i32
    return %arg0, %arg1 : i32, i32
  }
  func.func @transform_1(%arg0: i32, %arg1: i32) -> (i32, i32) {
    %c0_i32 = arith.constant 0 : i32
    %c0_i32_0 = arith.constant 0 : i32
    %c0_i32_1 = arith.constant 0 : i32
    return %c0_i32, %c0_i32_0 : i32, i32
  }
  func.func @transform_2(%arg0: i32, %arg1: i32) -> (i32, i32) {
    %c0_i32 = arith.constant 0 : i32
    %c0_i32_0 = arith.constant 0 : i32
    return %arg0, %c0_i32 : i32, i32
  }
}

</mosaic_0001>

<llo_original>
// kernel: tpu_custom_call.1
$region0: #{tpu_custom_call.1}
  #allocation0 [shape = 'u32[]', space=smem, size = 0x4, offset = 0x4, fixed_abs, tag = 'smem constant byte address 0x4 - core index']
  #allocation1 [shape = 'u32[72,128]{1,0:T(1,128)}', space=vmem, size = 0x9000, scoped, tag = 'internal scratch']
  #allocation2 [shape = 'f32[128,128]{1,0:T(8,128)}', space=vmem, size = 0x10000, scoped, tag = 'scratch operand']
  %s0 = inlined_call_operand.hbm [shape: f32[128,128], index: 0, kind: input, shape index: {}]
  %s1 = inlined_call_operand.hbm [shape: f32[128,128], index: 1, kind: input, shape index: {}]
  %s2 = inlined_call_operand.hbm [shape: f32[128,128], index: 2, kind: output, shape index: {}]
  %s3 = sld [smem:[#allocation0]]
  $region34: #{tpu_custom_call.1} parent=0
    _
  %s5 = ssub.s32 1, %s3
  %s6 = scalar_select 0, %s5, %s3
  $region1: #{tpu_custom_call.1} parent=0
    #allocation3 [shape = 'u8[65536]{0}', space=vmem, size = 0x10000, scoped, tag = 'input window, operand 0, single buffered']
    #allocation4 [shape = 's32[1]{0}', space=sflag, size = 0x4, scoped, tag = 'scoped memory for tpu_custom_call.1']
    #allocation5 [shape = 's32[1]{0}', space=sflag, size = 0x4, scoped, tag = 'scoped memory for tpu_custom_call.1']
    #allocation6 [shape = 'u8[65536]{0}', space=vmem, size = 0x10000, scoped, tag = 'input window, operand 1, single buffered']
    #allocation7 [shape = 's32[1]{0}', space=sflag, size = 0x4, scoped, tag = 'scoped memory for tpu_custom_call.1']
    #allocation8 [shape = 'u8[65536]{0}', space=vmem, size = 0x10000, scoped, tag = 'output window, operand 0, single buffered']
    %7 = vsyncpa [#allocation4], 0
    %8 = vsyncpa [#allocation7], 0
    %9 = vsyncpa [#allocation5], 0
    // Predicated region
    $region2: #{tpu_custom_call.1} parent=1 // pred_check
      _
    $region3: #{tpu_custom_call.1} parent=1 // pred_check_branch
      %11 = sbr.rel (0) target = $region5
    $region4: #{tpu_custom_call.1} parent=1 // pred_region
      %13 = vsyncadd [#allocation4], 0
      %s14 = sshll.u32 %s0, 4
      %s15 = int_to_ptr.hbm [resolvable:$true] %s14
      %s16 = sshll.u32 [#allocation3], 4
      %s17 = int_to_ptr.vmem [resolvable:$true] %s16
      %22 = dma.hbm_to_vmem [thread:$0]  %s15, 2048, %s17, [#allocation4], 128, 128, 8
    $region5: #{tpu_custom_call.1} parent=1 // pred_fallthru
      _
    // Predicated region
    $region6: #{tpu_custom_call.1} parent=1 // pred_check
      _
    $region7: #{tpu_custom_call.1} parent=1 // pred_check_branch
      %24 = sbr.rel (0) target = $region9
    $region8: #{tpu_custom_call.1} parent=1 // pred_region
      %26 = vsyncadd [#allocation7], 0
      %s27 = sshll.u32 %s1, 4
      %s28 = int_to_ptr.hbm [resolvable:$true] %s27
      %s29 = sshll.u32 [#allocation6], 4
      %s30 = int_to_ptr.vmem [resolvable:$true] %s29
      %35 = dma.hbm_to_vmem [thread:$0]  %s28, 2048, %s30, [#allocation7], 128, 128, 8
    $region9: #{tpu_custom_call.1} parent=1 // pred_fallthru
      _
    // Predicated region
    $region10: #{tpu_custom_call.1} parent=1 // pred_check
      _
    $region11: #{tpu_custom_call.1} parent=1 // pred_check_branch
      %37 = sbr.rel (0) target = $region13
    $region12: #{tpu_custom_call.1} parent=1 // pred_region
      %39 = dma.done [#allocation4], 2048
    $region13: #{tpu_custom_call.1} parent=1 // pred_fallthru
      _
    // Predicated region
    $region14: #{tpu_custom_call.1} parent=1 // pred_check
      _
    $region15: #{tpu_custom_call.1} parent=1 // pred_check_branch
      %41 = sbr.rel (0) target = $region17
    $region16: #{tpu_custom_call.1} parent=1 // pred_region
      %43 = dma.done [#allocation7], 2048
    $region17: #{tpu_custom_call.1} parent=1 // pred_fallthru
      _
    %p44 = scmp.eq.s32.totalorder 0, 0
    // Predicated region
    $region18: #{tpu_custom_call.1} parent=1 // pred_check
      %p45 = pneg %p44
    $region19: #{tpu_custom_call.1} parent=1 // pred_check_branch
      %47 = sbr.rel (%p45) target = $region21
    $region20: #{tpu_custom_call.1} parent=1 // pred_region
      %48 = vst [vmem:[#allocation2] sm:$0xff] 0.0
      %49 = vst [vmem:[#allocation2 + $0x8] sm:$0xff] 0.0
      %50 = vst [vmem:[#allocation2 + $0x10] sm:$0xff] 0.0
      %51 = vst [vmem:[#allocation2 + $0x18] sm:$0xff] 0.0
      %52 = vst [vmem:[#allocation2 + $0x20] sm:$0xff] 0.0
      %53 = vst [vmem:[#allocation2 + $0x28] sm:$0xff] 0.0
      %54 = vst [vmem:[#allocation2 + $0x30] sm:$0xff] 0.0
      %55 = vst [vmem:[#allocation2 + $0x38] sm:$0xff] 0.0
      %56 = vst [vmem:[#allocation2 + $0x40] sm:$0xff] 0.0
      %57 = vst [vmem:[#allocation2 + $0x48] sm:$0xff] 0.0
      %58 = vst [vmem:[#allocation2 + $0x50] sm:$0xff] 0.0
      %59 = vst [vmem:[#allocation2 + $0x58] sm:$0xff] 0.0
      %60 = vst [vmem:[#allocation2 + $0x60] sm:$0xff] 0.0
      %61 = vst [vmem:[#allocation2 + $0x68] sm:$0xff] 0.0
      %62 = vst [vmem:[#allocation2 + $0x70] sm:$0xff] 0.0
      %63 = vst [vmem:[#allocation2 + $0x78] sm:$0xff] 0.0
    $region21: #{tpu_custom_call.1} parent=1 // pred_fallthru
      _
    %v64 = vld [vmem:[#allocation3] sm:$0xff]
    %v65 = vld [vmem:[#allocation3 + $0x8] sm:$0xff]
    %v66 = vld [vmem:[#allocation3 + $0x10] sm:$0xff]
    %v67 = vld [vmem:[#allocation3 + $0x18] sm:$0xff]
    %v68 = vld [vmem:[#allocation3 + $0x20] sm:$0xff]
    %v69 = vld [vmem:[#allocation3 + $0x28] sm:$0xff]
    %v70 = vld [vmem:[#allocation3 + $0x30] sm:$0xff]
    %v71 = vld [vmem:[#allocation3 + $0x38] sm:$0xff]
    %v72 = vld [vmem:[#allocation3 + $0x40] sm:$0xff]
    %v73 = vld [vmem:[#allocation3 + $0x48] sm:$0xff]
    %v74 = vld [vmem:[#allocation3 + $0x50] sm:$0xff]
    %v75 = vld [vmem:[#allocation3 + $0x58] sm:$0xff]
    %v76 = vld [vmem:[#allocation3 + $0x60] sm:$0xff]
    %v77 = vld [vmem:[#allocation3 + $0x68] sm:$0xff]
    %v78 = vld [vmem:[#allocation3 + $0x70] sm:$0xff]
    %v79 = vld [vmem:[#allocation3 + $0x78] sm:$0xff]
    %s80 = smul.u32 0, 128
    %s81 = scalar_lea.vmem [#allocation6], %s80
    %v82 = vld [vmem:[%s81] sm:$0xff]
    %v83 = vld [vmem:[%s81 + $0x8] sm:$0xff]
    %v84 = vld [vmem:[%s81 + $0x10] sm:$0xff]
    %v85 = vld [vmem:[%s81 + $0x18] sm:$0xff]
    %v86 = vld [vmem:[%s81 + $0x20] sm:$0xff]
    %v87 = vld [vmem:[%s81 + $0x28] sm:$0xff]
    %v88 = vld [vmem:[%s81 + $0x30] sm:$0xff]
    %v89 = vld [vmem:[%s81 + $0x38] sm:$0xff]
    %v90 = vld [vmem:[%s81 + $0x40] sm:$0xff]
    %v91 = vld [vmem:[%s81 + $0x48] sm:$0xff]
    %v92 = vld [vmem:[%s81 + $0x50] sm:$0xff]
    %v93 = vld [vmem:[%s81 + $0x58] sm:$0xff]
    %v94 = vld [vmem:[%s81 + $0x60] sm:$0xff]
    %v95 = vld [vmem:[%s81 + $0x68] sm:$0xff]
    %v96 = vld [vmem:[%s81 + $0x70] sm:$0xff]
    %v97 = vld [vmem:[%s81 + $0x78] sm:$0xff]
    %v98 = vld [vmem:[#allocation2] sm:$0xff]
    %v99 = vld [vmem:[#allocation2 + $0x8] sm:$0xff]
    %v100 = vld [vmem:[#allocation2 + $0x10] sm:$0xff]
    %v101 = vld [vmem:[#allocation2 + $0x18] sm:$0xff]
    %v102 = vld [vmem:[#allocation2 + $0x20] sm:$0xff]
    %v103 = vld [vmem:[#allocation2 + $0x28] sm:$0xff]
    %v104 = vld [vmem:[#allocation2 + $0x30] sm:$0xff]
    %v105 = vld [vmem:[#allocation2 + $0x38] sm:$0xff]
    %v106 = vld [vmem:[#allocation2 + $0x40] sm:$0xff]
    %v107 = vld [vmem:[#allocation2 + $0x48] sm:$0xff]
    %v108 = vld [vmem:[#allocation2 + $0x50] sm:$0xff]
    %v109 = vld [vmem:[#allocation2 + $0x58] sm:$0xff]
    %v110 = vld [vmem:[#allocation2 + $0x60] sm:$0xff]
    %v111 = vld [vmem:[#allocation2 + $0x68] sm:$0xff]
    %v112 = vld [vmem:[#allocation2 + $0x70] sm:$0xff]
    %v113 = vld [vmem:[#allocation2 + $0x78] sm:$0xff]
    %114 = vmatpush.msra.mxu0 %v97
    %115 = vmatpush.msra.mxu0 %v96
    %116 = vmatpush.msra.mxu0 %v95
    %117 = vmatpush.msra.mxu0 %v94
    %118 = vmatpush.msra.mxu0 %v93
    %119 = vmatpush.msra.mxu0 %v92
    %120 = vmatpush.msra.mxu0 %v91
    %121 = vmatpush.msra.mxu0 %v90
    %122 = vmatpush.msra.mxu0 %v89
    %123 = vmatpush.msra.mxu0 %v88
    %124 = vmatpush.msra.mxu0 %v87
    %125 = vmatpush.msra.mxu0 %v86
    %126 = vmatpush.msra.mxu0 %v85
    %127 = vmatpush.msra.mxu0 %v84
    %128 = vmatpush.msra.mxu0 %v83
    %129 = vmatpush.msra.mxu0 %v82
    %130 = vmatmul.f32.gmra.mxu0 %v64
    %v131 = vpop.f32.mrf.mxu0
    %v132 = vadd.f32 0.0, %v131
    %133 = vmatmul.f32.gmra.mxu0 %v65
    %v134 = vpop.f32.mrf.mxu0
    %v135 = vadd.f32 0.0, %v134
    %136 = vmatmul.f32.gmra.mxu0 %v66
    %v137 = vpop.f32.mrf.mxu0
    %v138 = vadd.f32 0.0, %v137
    %139 = vmatmul.f32.gmra.mxu0 %v67
    %v140 = vpop.f32.mrf.mxu0
    %v141 = vadd.f32 0.0, %v140
    %142 = vmatmul.f32.gmra.mxu0 %v68
    %v143 = vpop.f32.mrf.mxu0
    %v144 = vadd.f32 0.0, %v143
    %145 = vmatmul.f32.gmra.mxu0 %v69
    %v146 = vpop.f32.mrf.mxu0
    %v147 = vadd.f32 0.0, %v146
    %148 = vmatmul.f32.gmra.mxu0 %v70
    %v149 = vpop.f32.mrf.mxu0
    %v150 = vadd.f32 0.0, %v149
    %151 = vmatmul.f32.gmra.mxu0 %v71
    %v152 = vpop.f32.mrf.mxu0
    %v153 = vadd.f32 0.0, %v152
    %154 = vmatmul.f32.gmra.mxu0 %v72
    %v155 = vpop.f32.mrf.mxu0
    %v156 = vadd.f32 0.0, %v155
    %157 = vmatmul.f32.gmra.mxu0 %v73
    %v158 = vpop.f32.mrf.mxu0
    %v159 = vadd.f32 0.0, %v158
    %160 = vmatmul.f32.gmra.mxu0 %v74
    %v161 = vpop.f32.mrf.mxu0
    %v162 = vadd.f32 0.0, %v161
    %163 = vmatmul.f32.gmra.mxu0 %v75
    %v164 = vpop.f32.mrf.mxu0
    %v165 = vadd.f32 0.0, %v164
    %166 = vmatmul.f32.gmra.mxu0 %v76
    %v167 = vpop.f32.mrf.mxu0
    %v168 = vadd.f32 0.0, %v167
    %169 = vmatmul.f32.gmra.mxu0 %v77
    %v170 = vpop.f32.mrf.mxu0
    %v171 = vadd.f32 0.0, %v170
    %172 = vmatmul.f32.gmra.mxu0 %v78
    %v173 = vpop.f32.mrf.mxu0
    %v174 = vadd.f32 0.0, %v173
    %175 = vmatmul.f32.gmra.mxu0 %v79
    %v176 = vpop.f32.mrf.mxu0
    %v177 = vadd.f32 0.0, %v176
    %178 = vdwg.mxu0
    %v179 = vadd.f32 %v98, %v132
    %v180 = vadd.f32 %v99, %v135
    %v181 = vadd.f32 %v100, %v138
    %v182 = vadd.f32 %v101, %v141
    %v183 = vadd.f32 %v102, %v144
    %v184 = vadd.f32 %v103, %v147
    %v185 = vadd.f32 %v104, %v150
    %v186 = vadd.f32 %v105, %v153
    %v187 = vadd.f32 %v106, %v156
    %v188 = vadd.f32 %v107, %v159
    %v189 = vadd.f32 %v108, %v162
    %v190 = vadd.f32 %v109, %v165
    %v191 = vadd.f32 %v110, %v168
    %v192 = vadd.f32 %v111, %v171
    %v193 = vadd.f32 %v112, %v174
    %v194 = vadd.f32 %v113, %v177
    %195 = vst [vmem:[#allocation2] sm:$0xff] %v179
    %196 = vst [vmem:[#allocation2 + $0x8] sm:$0xff] %v180
    %197 = vst [vmem:[#allocation2 + $0x10] sm:$0xff] %v181
    %198 = vst [vmem:[#allocation2 + $0x18] sm:$0xff] %v182
    %199 = vst [vmem:[#allocation2 + $0x20] sm:$0xff] %v183
    %200 = vst [vmem:[#allocation2 + $0x28] sm:$0xff] %v184
    %201 = vst [vmem:[#allocation2 + $0x30] sm:$0xff] %v185
    %202 = vst [vmem:[#allocation2 + $0x38] sm:$0xff] %v186
    %203 = vst [vmem:[#allocation2 + $0x40] sm:$0xff] %v187
    %204 = vst [vmem:[#allocation2 + $0x48] sm:$0xff] %v188
    %205 = vst [vmem:[#allocation2 + $0x50] sm:$0xff] %v189
    %206 = vst [vmem:[#allocation2 + $0x58] sm:$0xff] %v190
    %207 = vst [vmem:[#allocation2 + $0x60] sm:$0xff] %v191
    %208 = vst [vmem:[#allocation2 + $0x68] sm:$0xff] %v192
    %209 = vst [vmem:[#allocation2 + $0x70] sm:$0xff] %v193
    %210 = vst [vmem:[#allocation2 + $0x78] sm:$0xff] %v194
    // Predicated region
    $region22: #{tpu_custom_call.1} parent=1 // pred_check
      %p211 = pneg %p44
    $region23: #{tpu_custom_call.1} parent=1 // pred_check_branch
      %213 = sbr.rel (%p211) target = $region25
    $region24: #{tpu_custom_call.1} parent=1 // pred_region
      %v214 = vld [vmem:[#allocation2] sm:$0xff]
      %v215 = vld [vmem:[#allocation2 + $0x8] sm:$0xff]
      %v216 = vld [vmem:[#allocation2 + $0x10] sm:$0xff]
      %v217 = vld [vmem:[#allocation2 + $0x18] sm:$0xff]
      %v218 = vld [vmem:[#allocation2 + $0x20] sm:$0xff]
      %v219 = vld [vmem:[#allocation2 + $0x28] sm:$0xff]
      %v220 = vld [vmem:[#allocation2 + $0x30] sm:$0xff]
      %v221 = vld [vmem:[#allocation2 + $0x38] sm:$0xff]
      %v222 = vld [vmem:[#allocation2 + $0x40] sm:$0xff]
      %v223 = vld [vmem:[#allocation2 + $0x48] sm:$0xff]
      %v224 = vld [vmem:[#allocation2 + $0x50] sm:$0xff]
      %v225 = vld [vmem:[#allocation2 + $0x58] sm:$0xff]
      %v226 = vld [vmem:[#allocation2 + $0x60] sm:$0xff]
      %v227 = vld [vmem:[#allocation2 + $0x68] sm:$0xff]
      %v228 = vld [vmem:[#allocation2 + $0x70] sm:$0xff]
      %v229 = vld [vmem:[#allocation2 + $0x78] sm:$0xff]
      %230 = vst [vmem:[#allocation8] sm:$0xff] %v214
      %231 = vst [vmem:[#allocation8 + $0x8] sm:$0xff] %v215
      %232 = vst [vmem:[#allocation8 + $0x10] sm:$0xff] %v216
      %233 = vst [vmem:[#allocation8 + $0x18] sm:$0xff] %v217
      %234 = vst [vmem:[#allocation8 + $0x20] sm:$0xff] %v218
      %235 = vst [vmem:[#allocation8 + $0x28] sm:$0xff] %v219
      %236 = vst [vmem:[#allocation8 + $0x30] sm:$0xff] %v220
      %237 = vst [vmem:[#allocation8 + $0x38] sm:$0xff] %v221
      %238 = vst [vmem:[#allocation8 + $0x40] sm:$0xff] %v222
      %239 = vst [vmem:[#allocation8 + $0x48] sm:$0xff] %v223
      %240 = vst [vmem:[#allocation8 + $0x50] sm:$0xff] %v224
      %241 = vst [vmem:[#allocation8 + $0x58] sm:$0xff] %v225
      %242 = vst [vmem:[#allocation8 + $0x60] sm:$0xff] %v226
      %243 = vst [vmem:[#allocation8 + $0x68] sm:$0xff] %v227
      %244 = vst [vmem:[#allocation8 + $0x70] sm:$0xff] %v228
      %245 = vst [vmem:[#allocation8 + $0x78] sm:$0xff] %v229
    $region25: #{tpu_custom_call.1} parent=1 // pred_fallthru
      _
    // Predicated region
    $region26: #{tpu_custom_call.1} parent=1 // pred_check
      _
    $region27: #{tpu_custom_call.1} parent=1 // pred_check_branch
      %247 = sbr.rel (0) target = $region29
    $region28: #{tpu_custom_call.1} parent=1 // pred_region
      %249 = vsyncadd [#allocation5], 0
      %s250 = sshll.u32 [#allocation8], 4
      %s251 = int_to_ptr.vmem [resolvable:$true] %s250
      %s252 = sshll.u32 %s2, 4
      %s253 = int_to_ptr.hbm [resolvable:$true] %s252
      %258 = dma.vmem_to_hbm [thread:$0]  %s251, 2048, %s253, [#allocation5], 128, 128, 8
    $region29: #{tpu_custom_call.1} parent=1 // pred_fallthru
      _
    // Predicated region
    $region30: #{tpu_custom_call.1} parent=1 // pred_check
      _
    $region31: #{tpu_custom_call.1} parent=1 // pred_check_branch
      %260 = sbr.rel (0) target = $region33
    $region32: #{tpu_custom_call.1} parent=1 // pred_region
      %262 = dma.done [#allocation5], 2048
    $region33: #{tpu_custom_call.1} parent=1 // pred_fallthru
      _
    %263 = vsyncpa [#allocation4], 1
    %264 = vsyncpa [#allocation7], 1
    %265 = vsyncpa [#allocation5], 1

</llo_original>
